<compile_context>
chip_gen: v7x
topology: tpu7x:2x2x1
jax: 0.10.0
libtpu: 0.0.40
codegen_flags: <defaults>
</compile_context>

<pallas_src>
import jax
import jax.numpy as jnp
from jax.experimental import pallas as pl
from jax.experimental.pallas import tpu as pltpu


def _round_up(x, m):
    return ((x + m - 1) // m) * m


def _vmem_capacity_bytes():
    """Physical VMEM of the current TPU generation (128 MiB fallback)."""
    try:
        cap = getattr(pltpu.get_tpu_info(), "vmem_capacity_bytes", None)
        if cap:
            return int(cap)
    except Exception:
        pass
    return 128 * 1024 * 1024


# ---------------------------------------------------------------------------
# Kernels
# ---------------------------------------------------------------------------
def _linear_kernel_resident_k(x_ref, w_ref, b_ref, o_ref):
    # Single K step: no accumulator scratch, no zero-init / += / reload passes.
    #   x_ref: (tm, K)   w_ref: (K, tn)   b_ref: (1, tn)   o_ref: (tm, tn)
    o_ref[...] = (
        jnp.dot(x_ref[...], w_ref[...], preferred_element_type=jnp.float32)
        + b_ref[...]
    ).astype(o_ref.dtype)


def _linear_kernel_tiled_k(x_ref, w_ref, b_ref, o_ref, acc_ref):
    # K-tiled accumulation (grid axis 2 is 'arbitrary' and innermost).
    #   x_ref: (tm, tk)   w_ref: (tk, tn)   b_ref: (1, tn)
    #   o_ref: (tm, tn)   acc_ref: (tm, tn) f32, resident across the K axis
    k = pl.program_id(2)
    prod = jnp.dot(x_ref[...], w_ref[...], preferred_element_type=jnp.float32)

    @pl.when(k == 0)
    def _():
        acc_ref[...] = prod + b_ref[...]      # init with first product + bias

    @pl.when(k > 0)
    def _():
        acc_ref[...] += prod

    @pl.when(k == pl.num_programs(2) - 1)
    def _():
        o_ref[...] = acc_ref[...].astype(o_ref.dtype)


# ---------------------------------------------------------------------------
# Parameter prep (do ONCE at init, not per forward call)
# ---------------------------------------------------------------------------
def prepare_params(weight, bias, *, param_dtype=None):
    """weight [N, K] (torch layout), bias [N] -> (w_t [K, N_pad], b2 [1, N_pad], N).

    Transposes to the MXU-canonical [K, N] layout, pads N to a multiple of 128
    (lane-dense full-width stores; zero weight columns -> zero logits in the
    padded lanes) and optionally casts (e.g. bf16 MXU inputs).  Run once at
    parameter-init time so the forward path does no per-call array rewrites.
    """
    N, K = weight.shape
    assert bias.shape == (N,)
    n_pad = _round_up(N, 128)
    w_t = weight.T                                  # [K, N]
    b = bias
    if n_pad != N:
        w_t = jnp.pad(w_t, ((0, 0), (0, n_pad - N)))
        b = jnp.pad(b, (0, n_pad - N))
    if param_dtype is not None:
        w_t = w_t.astype(param_dtype)
    b2 = b.astype(jnp.float32).reshape(1, n_pad)
    return w_t, b2, N


# ---------------------------------------------------------------------------
# Forward
# ---------------------------------------------------------------------------
def linear_forward(x, w_t, b2, n_valid, *, tm=None, out_dtype=None,
                   force_pallas=False, k_tile=None):
    """y = x @ w_t + b2, sliced back to n_valid classes.  w_t is [K, N_pad]."""
    B, K = x.shape
    Kw, n_pad = w_t.shape
    assert Kw == K and b2.shape == (1, n_pad) and n_pad % 128 == 0
    out_dtype = out_dtype or x.dtype

    # Tiny problems: per-step overhead + (8,128) vreg padding dominate; let
    # plain XLA handle them unless explicitly forced.
    if not force_pallas and (B * K * n_pad) < (1 << 18):
        out = (jnp.dot(x, w_t, preferred_element_type=jnp.float32)
               + b2).astype(out_dtype)
        return out if n_pad == n_valid else out[:, :n_valid]

    x_itm = jnp.dtype(x.dtype).itemsize
    w_itm = jnp.dtype(w_t.dtype).itemsize
    o_itm = jnp.dtype(out_dtype).itemsize

    # ---- N (class) tiling: full n_pad when narrow, bounded tile otherwise.
    if n_pad <= 2048:
        tn = n_pad
    else:
        tn = next(c for c in (2048, 1024, 512, 256, 128) if n_pad % c == 0)
    gn = n_pad // tn

    # ---- Row tiling: multiple of 8; aim for >= 2 steps so the 'parallel'
    # axis can shard across v7x's 2 TensorCores; >= 128 rows for DMA efficiency.
    if tm is None:
        tm = min(512, max(128, _round_up(pl.cdiv(B, 2), 8)))
    tm = max(8, _round_up(min(tm, B), 8))
    if w_itm == 2 and tm >= 16:
        tm = _round_up(tm, 16)           # bf16 packs 2 rows per sublane

    budget = int(0.75 * _vmem_capacity_bytes())

    def footprint(tm_, tk_, gk_):
        w_bufs = 1 if (gk_ == 1 and gn == 1) else 2
        b_bufs = 1 if gn == 1 else 2
        fp = (tm_ * tk_ * x_itm * 2           # x tile, double buffered
              + tk_ * tn * w_itm * w_bufs     # weight tile
              + tm_ * tn * o_itm * 2          # output tile, double buffered
              + tn * 4 * b_bufs)              # bias
        if gk_ > 1:
            fp += tm_ * tn * 4                # f32 accumulator scratch
        return fp

    # ---- K tiling: keep K resident whenever it fits the budget (common case
    # -> no accumulator at all); otherwise tile K with an f32 scratch.
    if k_tile is not None and k_tile < K:
        assert k_tile % 128 == 0
        tk = k_tile
    elif footprint(tm, K, 1) <= budget:
        tk = K
    else:
        tk = 512
        while footprint(tm, tk, 2) > budget and tm > 128:
            tm = max(128, tm // 2)
        while footprint(tm, tk, 2) > budget and tk > 128:
            tk //= 2
    gk = pl.cdiv(K, tk)
    if gk > 1 and gk * tk != K:
        # TODO(synk): mask the K tail in-kernel instead of padding x per call.
        kp = gk * tk
        x = jnp.pad(x, ((0, 0), (0, kp - K)))
        w_t = jnp.pad(w_t, ((0, kp - K), (0, 0)))

    grid = (pl.cdiv(B, tm), gn, gk)

    # ---- BlockSpecs.  Constant index maps get a single buffer (a second
    # buffer would only waste VMEM).
    x_spec = pl.BlockSpec((tm, tk), lambda i, j, k: (i, k))
    if gk == 1 and gn == 1:
        w_spec = pl.BlockSpec((tk, tn), lambda i, j, k: (k, j),
                              pipeline_mode=pl.Buffered(1))
    else:
        w_spec = pl.BlockSpec((tk, tn), lambda i, j, k: (k, j))
    if gn == 1:
        b_spec = pl.BlockSpec((1, tn), lambda i, j, k: (0, j),
                              pipeline_mode=pl.Buffered(1))
    else:
        b_spec = pl.BlockSpec((1, tn), lambda i, j, k: (0, j))
    o_spec = pl.BlockSpec((tm, tn), lambda i, j, k: (i, j))

    if gk == 1:
        kernel = _linear_kernel_resident_k
        scratch = []
    else:
        kernel = _linear_kernel_tiled_k
        scratch = [pltpu.VMEM((tm, tn), jnp.float32)]

    vmem_limit = int(min(0.85 * _vmem_capacity_bytes(),
                         max(2 * footprint(tm, tk, gk), 8 * 1024 * 1024)))

    out = pl.pallas_call(
        kernel,
        out_shape=jax.ShapeDtypeStruct((B, n_pad), out_dtype),
        grid_spec=pltpu.PrefetchScalarGridSpec(
            num_scalar_prefetch=0,
            grid=grid,
            in_specs=[x_spec, w_spec, b_spec],
            out_specs=o_spec,
            scratch_shapes=scratch,
        ),
        compiler_params=pltpu.CompilerParams(
            dimension_semantics=("parallel", "parallel", "arbitrary"),
            vmem_limit_bytes=vmem_limit,
        ),
    )(x, w_t, b2)

    # Padded class lanes hold zero logits; slice only when padding exists.
    return out if n_pad == n_valid else out[:, :n_valid]


def softmax_regression_forward(x, weight, bias, *, tm=None, use_bf16=False,
                               force_pallas=False, k_tile=None):
    """torch.nn.Linear forward: y = x @ weight.T + bias (weight in [N, K] layout).

    NOTE: for repeated calls, run prepare_params once at init and call
    linear_forward directly; this convenience wrapper re-prepares per call.
    """
    out_dtype = x.dtype
    w_t, b2, n_valid = prepare_params(
        weight, bias, param_dtype=jnp.bfloat16 if use_bf16 else None)
    if use_bf16:
        x = x.astype(jnp.bfloat16)
    return linear_forward(x, w_t, b2, n_valid, tm=tm, out_dtype=out_dtype,
                          force_pallas=force_pallas, k_tile=k_tile)


if __name__ == "__main__":
    # Small shapes consistent with the module: batch=8, input_dim=32, num_classes=16
    batch, input_dim, num_classes = 8, 32, 16

    key = jax.random.PRNGKey(0)
    kx, kw, kb = jax.random.split(key, 3)

    x = jax.random.normal(kx, (batch, input_dim), dtype=jnp.float32)
    # Deterministic parameter init (mimics nn.Linear's uniform(-1/sqrt(K), 1/sqrt(K)))
    bound = 1.0 / jnp.sqrt(jnp.float32(input_dim))
    weight = jax.random.uniform(kw, (num_classes, input_dim),
                                minval=-bound, maxval=bound, dtype=jnp.float32)
    bias = jax.random.uniform(kb, (num_classes,),
                              minval=-bound, maxval=bound, dtype=jnp.float32)

    ref = x @ weight.T + bias

    # 1) Pallas resident-K kernel (forced; these shapes would dispatch to XLA).
    out = jax.block_until_ready(
        softmax_regression_forward(x, weight, bias, force_pallas=True))
    assert out.shape == (batch, num_classes)
    assert jnp.allclose(out, ref, atol=1e-5, rtol=1e-5)

    # 2) bf16-MXU path (f32 accumulation), looser tolerance.
    out_bf16 = jax.block_until_ready(
        softmax_regression_forward(x, weight, bias, force_pallas=True,
                                   use_bf16=True))
    assert jnp.allclose(out_bf16, ref, atol=5e-2, rtol=5e-2)

    # 3) K-tiled accumulator kernel (bias folded into the k==0 init).
    k2 = 512
    x2 = jax.random.normal(jax.random.PRNGKey(1), (16, k2), dtype=jnp.float32)
    w2 = jax.random.uniform(jax.random.PRNGKey(2), (num_classes, k2),
                            minval=-0.05, maxval=0.05, dtype=jnp.float32)
    b2v = jax.random.uniform(jax.random.PRNGKey(3), (num_classes,),
                             minval=-0.05, maxval=0.05, dtype=jnp.float32)
    ref2 = x2 @ w2.T + b2v
    out2 = jax.block_until_ready(
        softmax_regression_forward(x2, w2, b2v, force_pallas=True, k_tile=128))
    assert out2.shape == (16, num_classes)
    assert jnp.allclose(out2, ref2, atol=1e-4, rtol=1e-4)

    # 4) Tiny-shape dispatch (plain XLA path).
    out_xla = jax.block_until_ready(softmax_regression_forward(x, weight, bias))
    assert jnp.allclose(out_xla, ref, atol=1e-5, rtol=1e-5)

    print("KERNEL_OK")
</pallas_src>

<mosaic_0001>
module attributes {stable_mosaic.version = 11 : i64} {
  func.func @_linear_kernel_resident_k(%arg0: i32, %arg1: i32, %arg2: i32, %arg3: memref<8x32xf32, #tpu.memory_space<vmem>>, %arg4: memref<32x128xf32, #tpu.memory_space<vmem>>, %arg5: memref<1x128xf32, #tpu.memory_space<vmem>>, %arg6: memref<8x128xf32, #tpu.memory_space<vmem>>) attributes {dimension_semantics = [#tpu.dimension_semantics<parallel>, #tpu.dimension_semantics<parallel>, #tpu.dimension_semantics<arbitrary>], iteration_bounds = array<i64: 1, 1, 1>, scalar_prefetch = 0 : i64, scratch_operands = 0 : i64, tpu.core_type = #tpu.core_type<tc>, window_params = [{transform_indices = @transform_0, window_bounds = array<i64: 8, 32>}, {pipeline_mode = #tpu.pipeline_mode<synchronous>, transform_indices = @transform_1, window_bounds = array<i64: 32, 128>}, {pipeline_mode = #tpu.pipeline_mode<synchronous>, transform_indices = @transform_2, window_bounds = array<i64: 1, 128>}, {transform_indices = @transform_3, window_bounds = array<i64: 8, 128>}]} {
    %c0 = arith.constant 0 : index
    %c0_0 = arith.constant 0 : index
    %0 = vector.load %arg3[%c0, %c0_0] : memref<8x32xf32, #tpu.memory_space<vmem>>, vector<8x32xf32>
    %c0_1 = arith.constant 0 : index
    %c0_2 = arith.constant 0 : index
    %1 = vector.load %arg4[%c0_1, %c0_2] : memref<32x128xf32, #tpu.memory_space<vmem>>, vector<32x128xf32>
    %cst = arith.constant dense<0.000000e+00> : vector<8x128xf32>
    %2 = tpu.matmul %0, %1, %cst {dimension_numbers = #tpu.dot_dimension_numbers<[1], [0], [0], [1], [0, 0, 1, 1], [], []>} : vector<8x32xf32>, vector<32x128xf32>, vector<8x128xf32> -> vector<8x128xf32>
    %c0_3 = arith.constant 0 : index
    %c0_4 = arith.constant 0 : index
    %3 = vector.load %arg5[%c0_3, %c0_4] : memref<1x128xf32, #tpu.memory_space<vmem>>, vector<1x128xf32>
    %4 = vector.broadcast %3 : vector<1x128xf32> to vector<8x128xf32>
    %5 = arith.addf %2, %4 : vector<8x128xf32>
    %c0_5 = arith.constant 0 : index
    %c0_6 = arith.constant 0 : index
    %6 = vector.load %arg6[%c0_5, %c0_6] : memref<8x128xf32, #tpu.memory_space<vmem>>, vector<8x128xf32>
    tpu.vector_store %arg6[%c0_5, %c0_6], %5 {strides = array<i32>} : memref<8x128xf32, #tpu.memory_space<vmem>>, vector<8x128xf32>,
    return
  }
  func.func @transform_0(%arg0: i32, %arg1: i32, %arg2: i32) -> (i32, i32) {
    %c0_i32 = arith.constant 0 : i32
    return %arg0, %arg2 : i32, i32
  }
  func.func @transform_1(%arg0: i32, %arg1: i32, %arg2: i32) -> (i32, i32) {
    %c0_i32 = arith.constant 0 : i32
    return %arg2, %arg1 : i32, i32
  }
  func.func @transform_2(%arg0: i32, %arg1: i32, %arg2: i32) -> (i32, i32) {
    %c0_i32 = arith.constant 0 : i32
    %c0_i32_0 = arith.constant 0 : i32
    return %c0_i32, %arg1 : i32, i32
  }
  func.func @transform_3(%arg0: i32, %arg1: i32, %arg2: i32) -> (i32, i32) {
    %c0_i32 = arith.constant 0 : i32
    return %arg0, %arg1 : i32, i32
  }
}

</mosaic_0001>

<llo_original>
// kernel: tpu_custom_call.1
$region0: #{tpu_custom_call.1}
  #allocation0 [shape = 'u32[]', space=smem, size = 0x4, offset = 0x4, fixed_abs, tag = 'smem constant byte address 0x4 - core index']
  #allocation1 [shape = 'u32[144,128]{1,0:T(1,128)}', space=vmem, size = 0x12000, scoped, tag = 'internal scratch']
  %s0 = inlined_call_operand.hbm [shape: f32[8,32], index: 0, kind: input, shape index: {}]
  %s1 = inlined_call_operand.hbm [shape: f32[32,128], index: 1, kind: input, shape index: {}]
  %s2 = inlined_call_operand.vmem [shape: f32[1,128], index: 2, kind: input, shape index: {}]
  %s3 = inlined_call_operand.hbm [shape: f32[8,128], index: 3, kind: output, shape index: {}]
  %s4 = sld [smem:[#allocation0]]
  $region30: #{tpu_custom_call.1} parent=0
    _
  %s6 = ssub.s32 1, %s4
  %s7 = scalar_select 0, %s6, %s4
  $region1: #{tpu_custom_call.1} parent=0
    #allocation2 [shape = 'u8[4096]{0}', space=vmem, size = 0x1000, scoped, tag = 'input window, operand 0, single buffered']
    #allocation3 [shape = 's32[1]{0}', space=sflag, size = 0x4, scoped, tag = 'scoped memory for tpu_custom_call.1']
    #allocation4 [shape = 's32[1]{0}', space=sflag, size = 0x4, scoped, tag = 'scoped memory for tpu_custom_call.1']
    #allocation5 [shape = 'u8[16384]{0}', space=vmem, size = 0x4000, scoped, tag = 'input window, operand 1, single buffered']
    #allocation6 [shape = 's32[1]{0}', space=sflag, size = 0x4, scoped, tag = 'scoped memory for tpu_custom_call.1']
    #allocation7 [shape = 'u8[4096]{0}', space=vmem, size = 0x1000, scoped, tag = 'output window, operand 0, single buffered']
    %8 = vsyncpa [#allocation3], 0
    %9 = vsyncpa [#allocation6], 0
    %10 = vsyncpa [#allocation4], 0
    // Predicated region
    $region2: #{tpu_custom_call.1} parent=1 // pred_check
      _
    $region3: #{tpu_custom_call.1} parent=1 // pred_check_branch
      %12 = sbr.rel (0) target = $region5
    $region4: #{tpu_custom_call.1} parent=1 // pred_region
      %s14 = ssub.s32 128, 128
      %15 = vsyncadd [#allocation3], %s14
      %s17 = sshll.u32 [#allocation2], 4
      %s18 = int_to_ptr.vmem [resolvable:$true] %s17
      %20 = dma.hbm_to_vmem [thread:$0]  %s0, 128, %s18, [#allocation3]
    $region5: #{tpu_custom_call.1} parent=1 // pred_fallthru
      _
    // Predicated region
    $region6: #{tpu_custom_call.1} parent=1 // pred_check
      _
    $region7: #{tpu_custom_call.1} parent=1 // pred_check_branch
      %22 = sbr.rel (0) target = $region9
    $region8: #{tpu_custom_call.1} parent=1 // pred_region
      %s24 = ssub.s32 512, 512
      %25 = vsyncadd [#allocation6], %s24
      %s26 = sshll.u32 [#allocation5], 4
      %s27 = int_to_ptr.vmem [resolvable:$true] %s26
      %32 = dma.hbm_to_vmem [thread:$0]  %s1, 512, %s27, [#allocation6], 128, 128, 8
    $region9: #{tpu_custom_call.1} parent=1 // pred_fallthru
      _
    // Predicated region
    $region10: #{tpu_custom_call.1} parent=1 // pred_check
      _
    $region11: #{tpu_custom_call.1} parent=1 // pred_check_branch
      %34 = sbr.rel (0) target = $region13
    $region12: #{tpu_custom_call.1} parent=1 // pred_region
      _
    $region13: #{tpu_custom_call.1} parent=1 // pred_fallthru
      _
    // Predicated region
    $region14: #{tpu_custom_call.1} parent=1 // pred_check
      _
    $region15: #{tpu_custom_call.1} parent=1 // pred_check_branch
      %36 = sbr.rel (0) target = $region17
    $region16: #{tpu_custom_call.1} parent=1 // pred_region
      %37 = dma.done [#allocation3], 128
    $region17: #{tpu_custom_call.1} parent=1 // pred_fallthru
      _
    // Predicated region
    $region18: #{tpu_custom_call.1} parent=1 // pred_check
      _
    $region19: #{tpu_custom_call.1} parent=1 // pred_check_branch
      %39 = sbr.rel (0) target = $region21
    $region20: #{tpu_custom_call.1} parent=1 // pred_region
      %40 = dma.done [#allocation6], 512
    $region21: #{tpu_custom_call.1} parent=1 // pred_fallthru
      _
    %v41 = vld [vmem:[#allocation2] sm:$0xff]
    %v42 = vld [vmem:[#allocation5] sm:$0xff]
    %v43 = vld [vmem:[#allocation5 + $0x8] sm:$0xff]
    %v44 = vld [vmem:[#allocation5 + $0x10] sm:$0xff]
    %v45 = vld [vmem:[#allocation5 + $0x18] sm:$0xff]
    %v46 = vld [vmem:[%s2] sm:$0x1]
    %v48 = vlaneseq
    %v49 = vshrl.u32 %v48, 7
    %v50 = vsub.s32 0, %v49
    %v51 = vrot.slane %v46, %v50
    %vm53 = vcmask 261120
    %v55 = vsel %vm53, %v41, 0
    %57 = vmatprep.subr.mxu0 0.0
    %58 = vmatpush1.msra.mxu0 %v42
    %59 = vmatprep.subr.mxu0 0.0
    %60 = vmatpush1.msra.mxu0 %v43
    %61 = vmatprep.subr.mxu0 0.0
    %62 = vmatpush1.msra.mxu0 %v44
    %63 = vmatprep.subr.mxu0 0.0
    %64 = vmatpush1.msra.mxu0 %v45
    %65 = vmatprep.subr.mxu0 0.0
    %66 = vmatpush1.msra.mxu0 0.0
    %67 = vmatprep.subr.mxu0 0.0
    %68 = vmatpush1.msra.mxu0 0.0
    %69 = vmatprep.subr.mxu0 0.0
    %70 = vmatpush1.msra.mxu0 0.0
    %71 = vmatprep.subr.mxu0 0.0
    %72 = vmatpush1.msra.mxu0 0.0
    %73 = vmatprep.subr.mxu0 0.0
    %74 = vmatpush1.msra.mxu0 0.0
    %75 = vmatprep.subr.mxu0 0.0
    %76 = vmatpush1.msra.mxu0 0.0
    %77 = vmatprep.subr.mxu0 0.0
    %78 = vmatpush1.msra.mxu0 0.0
    %79 = vmatprep.subr.mxu0 0.0
    %80 = vmatpush1.msra.mxu0 0.0
    %81 = vmatprep.subr.mxu0 0.0
    %82 = vmatpush1.msra.mxu0 0.0
    %83 = vmatprep.subr.mxu0 0.0
    %84 = vmatpush1.msra.mxu0 0.0
    %85 = vmatprep.subr.mxu0 0.0
    %86 = vmatpush1.msra.mxu0 0.0
    %87 = vmatprep.subr.mxu0 0.0
    %88 = vmatpush1.msra.mxu0 0.0
    %89 = vmatprep.subr.mxu0 0.0
    %90 = vmatpush1.msra.mxu0 0.0
    %91 = vmatprep.subr.mxu0 0.0
    %92 = vmatpush1.msra.mxu0 0.0
    %93 = vmatprep.subr.mxu0 0.0
    %94 = vmatpush1.msra.mxu0 0.0
    %95 = vmatprep.subr.mxu0 0.0
    %96 = vmatpush1.msra.mxu0 0.0
    %97 = vmatprep.subr.mxu0 0.0
    %98 = vmatpush1.msra.mxu0 0.0
    %99 = vmatprep.subr.mxu0 0.0
    %100 = vmatpush1.msra.mxu0 0.0
    %101 = vmatprep.subr.mxu0 0.0
    %102 = vmatpush1.msra.mxu0 0.0
    %103 = vmatprep.subr.mxu0 0.0
    %104 = vmatpush1.msra.mxu0 0.0
    %105 = vmatprep.subr.mxu0 0.0
    %106 = vmatpush1.msra.mxu0 0.0
    %107 = vmatprep.subr.mxu0 0.0
    %108 = vmatpush1.msra.mxu0 0.0
    %109 = vmatprep.subr.mxu0 0.0
    %110 = vmatpush1.msra.mxu0 0.0
    %111 = vmatprep.subr.mxu0 0.0
    %112 = vmatpush1.msra.mxu0 0.0
    %113 = vmatprep.subr.mxu0 0.0
    %114 = vmatpush1.msra.mxu0 0.0
    %115 = vmatprep.subr.mxu0 0.0
    %116 = vmatpush1.msra.mxu0 0.0
    %117 = vmatprep.subr.mxu0 0.0
    %118 = vmatpush1.msra.mxu0 0.0
    %119 = vmatprep.subr.mxu0 0.0
    %120 = vmatpush1.msra.mxu0 0.0
    %121 = vmatprep.mubr.f32.mxu0 0.0
    %122 = vmatmul.mubr.f32.gmra.mrb[0].mxu0 %v55
    %v123 = vpop.f32.mrb[0].mxu0
    %v124 = vadd.f32 %v51, %v123
    %v125 = vpop.f32.mrb[0].mxu0
    %126 = vdwg.mxu0
    %127 = vst [vmem:[#allocation7] sm:$0xff] %v124
    // Predicated region
    $region22: #{tpu_custom_call.1} parent=1 // pred_check
      _
    $region23: #{tpu_custom_call.1} parent=1 // pred_check_branch
      %129 = sbr.rel (0) target = $region25
    $region24: #{tpu_custom_call.1} parent=1 // pred_region
      %s131 = ssub.s32 128, 128
      %132 = vsyncadd [#allocation4], %s131
      %s134 = sshll.u32 [#allocation7], 4
      %s135 = int_to_ptr.vmem [resolvable:$true] %s134
      %137 = dma.vmem_to_hbm [thread:$0]  %s135, 128, %s3, [#allocation4]
    $region25: #{tpu_custom_call.1} parent=1 // pred_fallthru
      _
    // Predicated region
    $region26: #{tpu_custom_call.1} parent=1 // pred_check
      _
    $region27: #{tpu_custom_call.1} parent=1 // pred_check_branch
      %139 = sbr.rel (0) target = $region29
    $region28: #{tpu_custom_call.1} parent=1 // pred_region
      %140 = dma.done [#allocation4], 128
    $region29: #{tpu_custom_call.1} parent=1 // pred_fallthru
      _
    %141 = vsyncpa [#allocation3], 1
    %142 = vsyncpa [#allocation6], 1
    %143 = vsyncpa [#allocation4], 1

</llo_original>
